<compile_context>
chip_gen: v6e
topology: v6e:2x2x1
jax: 0.10.0
libtpu: 0.0.40
codegen_flags: <defaults>
</compile_context>

<pallas_src>
import functools

import jax
import jax.numpy as jnp
from jax.experimental import pallas as pl
from jax.experimental.pallas import tpu as pltpu


# ----------------------------------------------------------------------------
# Constants / parameter-slab layout
# ----------------------------------------------------------------------------
F_PAD = 16                      # all hidden activations padded to 16 features
W_ROWS = 32                     # per-layer stacked [W1; W2], padded to (32, 16)
N_LAYERS = 6
BIAS_ROW0 = N_LAYERS * W_ROWS   # 192 : bias rows start here (one row per layer)
SLAB_ROWS = 200                 # 192 weight rows + 6 bias rows + 2 pad rows
D_OUT = 8                       # module output width (block2 -> 8)

LAYER_ORDER = (
    "block1_gnn1", "block1_gnn2",
    "blockr_gnn1", "blockr_gnn2",
    "block2_gnn1", "block2_gnn2",
)


# ----------------------------------------------------------------------------
# Fused Pallas kernel: the whole Feature_Extraction_Module forward (per graph).
#   per layer:  h    = S @ x                      (2N,16)  one bf16 MXU propagation
#               hcat = [h[:N] | h[N:]]            (N, 32)  lane concat (XLU, free slot)
#               y    = relu(hcat @ [W1;W2] + b)   (N, 16)  one bf16 MXU matmul
#   residual wiring identical to the PyTorch module.
# ----------------------------------------------------------------------------
def _fem_kernel(s_ref, slab_ref, x_ref, o_ref):
    n = x_ref.shape[0]
    s = s_ref[...]                                   # (2N, N) bf16, loaded once

    def layer(x_f32, idx):
        h = jnp.dot(s, x_f32.astype(jnp.bfloat16),
                    preferred_element_type=jnp.float32)            # (2N, 16) f32
        hcat = jnp.concatenate([h[:n], h[n:]], axis=1)             # (N, 32) f32
        w = slab_ref[pl.ds(idx * W_ROWS, W_ROWS), :]               # (32, 16) f32
        b = slab_ref[pl.ds(BIAS_ROW0 + idx, 1), :]                 # (1, 16)  f32
        y = jnp.dot(hcat.astype(jnp.bfloat16), w.astype(jnp.bfloat16),
                    preferred_element_type=jnp.float32) + b        # f32 bias add
        return jnp.maximum(y, 0.0)                                 # f32 ReLU (VPU)

    x = x_ref[...]                                   # (N, 16) f32 (zero-padded)

    # block1
    a1 = layer(x, 0)
    a2 = layer(a1, 1)
    x1 = a1 + a2

    # block_res
    r1 = layer(x1, 2)
    r2 = layer(r1, 3)
    x1 = x1 + (r1 + r2)

    # block2
    c1 = layer(x1, 4)
    c2 = layer(c1, 5)

    # TODO(synk): for large batches, pack per-graph 8-wide outputs lane-dense
    # (>=128 lanes) instead of a last-dim-8 masked store; negligible at B=4.
    o_ref[...] = (c1 + c2)[:, :D_OUT]                # single store of the output


@jax.jit
def feature_extraction_module(s_bf16, slab, x):
    """x: (B, N, F_in) node features, B graphs sharing the operator S."""
    b, n, f_in = x.shape
    x_pad = jnp.pad(x.astype(jnp.float32), ((0, 0), (0, 0), (0, F_PAD - f_in)))

    return pl.pallas_call(
        _fem_kernel,
        out_shape=jax.ShapeDtypeStruct((b, n, D_OUT), jnp.float32),
        grid=(b,),
        in_specs=[
            pl.BlockSpec((2 * n, n), lambda i: (0, 0)),          # S: resident
            pl.BlockSpec((SLAB_ROWS, F_PAD), lambda i: (0, 0)),  # params: 1 DMA
            pl.BlockSpec((None, n, F_PAD), lambda i: (i, 0, 0)), # per-graph X
        ],
        out_specs=pl.BlockSpec((None, n, D_OUT), lambda i: (i, 0, 0)),
        compiler_params=pltpu.CompilerParams(dimension_semantics=("parallel",)),
    )(s_bf16, slab, x_pad)


# ----------------------------------------------------------------------------
# Graph-operator construction (plain-JAX glue, not the hot path)
# ----------------------------------------------------------------------------
def build_ahat(edge_index, n):
    """Row-normalized adjacency with self loops, dense [N, N]."""
    # TODO(synk): MultiScaleGNN's exact normalization is unknown (source not
    # provided); this row-mean with clamped multi-edges is a stand-in.
    src, dst = edge_index[0], edge_index[1]
    adj = jnp.zeros((n, n), jnp.float32)
    adj = adj.at[dst, src].add(1.0)
    adj = adj.at[src, dst].add(1.0)
    adj = jnp.minimum(adj, 1.0) + jnp.eye(n, dtype=jnp.float32)
    deg = adj.sum(axis=1, keepdims=True)
    return adj / jnp.maximum(deg, 1.0)


def build_community_projector(com_div, com_num, n):
    """P[i, j] = 1/|C| if nodes i, j share community C, else 0 (community mean)."""
    onehot = jax.nn.one_hot(com_div, com_num, dtype=jnp.float32)     # [N, K]
    counts = jnp.maximum(onehot.sum(axis=0), 1.0)                    # [K]
    return (onehot / counts) @ onehot.T                              # [N, N]


# ----------------------------------------------------------------------------
# Deterministic parameter init + single-slab packing
# ----------------------------------------------------------------------------
def init_gnn_params(key, d_in, d_out):
    k1, k2, k3 = jax.random.split(key, 3)
    scale = 1.0 / jnp.sqrt(jnp.float32(d_in))
    w1 = jax.random.normal(k1, (d_in, d_out), jnp.float32) * scale
    w2 = jax.random.normal(k2, (d_in, d_out), jnp.float32) * scale
    b = jax.random.normal(k3, (1, d_out), jnp.float32) * 0.1   # nonzero bias
    return (w1, w2, b)


def init_params(key):
    keys = jax.random.split(key, 6)
    return {
        "block1_gnn1": init_gnn_params(keys[0], 9, 16),
        "block1_gnn2": init_gnn_params(keys[1], 16, 16),
        "blockr_gnn1": init_gnn_params(keys[2], 16, 16),
        "blockr_gnn2": init_gnn_params(keys[3], 16, 16),
        "block2_gnn1": init_gnn_params(keys[4], 16, 8),
        "block2_gnn2": init_gnn_params(keys[5], 8, 8),
    }


def pack_param_slab(params):
    """All 6x{W1,W2,b} packed into one zero-padded (200, 16) f32 slab."""
    slab = jnp.zeros((SLAB_ROWS, F_PAD), jnp.float32)
    for i, name in enumerate(LAYER_ORDER):
        w1, w2, b = params[name]
        f_in, f_out = w1.shape
        r = i * W_ROWS
        slab = slab.at[r:r + f_in, :f_out].set(w1)                     # rows [0,16)
        slab = slab.at[r + F_PAD:r + F_PAD + f_in, :f_out].set(w2)     # rows [16,32)
        slab = slab.at[BIAS_ROW0 + i, :f_out].set(b[0])
    return slab


if __name__ == "__main__":
    B = 4           # graphs per batch (parallel grid axis)
    N = 32          # nodes per graph
    E = 64          # edges
    COM_NUM = 4     # communities
    F_IN = 9        # fixed by Feature_Extraction_Module(9 -> 16 -> 16 -> 8)

    key = jax.random.PRNGKey(0)
    kx, ke, kc, kp = jax.random.split(key, 4)

    X = jax.random.normal(kx, (B, N, F_IN), jnp.float32)
    edge_index = jax.random.randint(ke, (2, E), 0, N, dtype=jnp.int32)
    com_div = jax.random.randint(kc, (N,), 0, COM_NUM, dtype=jnp.int32)

    ahat = build_ahat(edge_index, N)
    pmat = build_community_projector(com_div, COM_NUM, N)
    params = init_params(kp)

    # Built ONCE outside the jitted wrapper: stacked bf16 operator + param slab.
    s_bf16 = jnp.concatenate([ahat, pmat], axis=0).astype(jnp.bfloat16)  # (2N, N)
    slab = pack_param_slab(params)                                       # (200, 16)

    out = feature_extraction_module(s_bf16, slab, X)
    out = jax.block_until_ready(out)

    # --- pure-JAX reference with the same bf16-MXU / f32-accumulate recipe ---
    ahat_bf = ahat.astype(jnp.bfloat16)
    pmat_bf = pmat.astype(jnp.bfloat16)

    def ref_layer(x, w1, w2, b):
        xb = x.astype(jnp.bfloat16)
        ha = jnp.dot(ahat_bf, xb, preferred_element_type=jnp.float32)
        hp = jnp.dot(pmat_bf, xb, preferred_element_type=jnp.float32)
        y = (jnp.dot(ha.astype(jnp.bfloat16), w1.astype(jnp.bfloat16),
                     preferred_element_type=jnp.float32)
             + jnp.dot(hp.astype(jnp.bfloat16), w2.astype(jnp.bfloat16),
                       preferred_element_type=jnp.float32)
             + b)
        return jnp.maximum(y, 0.0)

    def ref_block(p1, p2, x):
        y1 = ref_layer(x, *p1)
        y2 = ref_layer(y1, *p2)
        return y1 + y2

    def ref_forward(x):
        x1 = ref_block(params["block1_gnn1"], params["block1_gnn2"], x)
        x1 = x1 + ref_block(params["blockr_gnn1"], params["blockr_gnn2"], x1)
        return ref_block(params["block2_gnn1"], params["block2_gnn2"], x1)

    ref = jnp.stack([ref_forward(X[b]) for b in range(B)])

    assert out.shape == (B, N, D_OUT), out.shape
    assert out.dtype == jnp.float32
    assert bool(jnp.all(jnp.isfinite(out)))
    assert bool(jnp.allclose(out, ref, atol=2e-3, rtol=2e-3)), float(
        jnp.max(jnp.abs(out - ref)))
    print("KERNEL_OK")
</pallas_src>

<mosaic_0001>
module attributes {stable_mosaic.version = 11 : i64} {
  func.func @_fem_kernel(%arg0: i32, %arg1: memref<64x32xbf16, #tpu.memory_space<vmem>>, %arg2: memref<200x16xf32, #tpu.memory_space<vmem>>, %arg3: memref<1x32x16xf32, #tpu.memory_space<vmem>>, %arg4: memref<1x32x8xf32, #tpu.memory_space<vmem>>) attributes {dimension_semantics = [#tpu.dimension_semantics<parallel>], iteration_bounds = array<i64: 4>, scalar_prefetch = 0 : i64, scratch_operands = 0 : i64, tpu.core_type = #tpu.core_type<tc>, window_params = [{pipeline_mode = #tpu.pipeline_mode<synchronous>, transform_indices = @transform_0, window_bounds = array<i64: 64, 32>}, {pipeline_mode = #tpu.pipeline_mode<synchronous>, transform_indices = @transform_1, window_bounds = array<i64: 200, 16>}, {transform_indices = @transform_2, window_bounds = array<i64: 1, 32, 16>}, {transform_indices = @transform_3, window_bounds = array<i64: 1, 32, 8>}]} {
    %c0 = arith.constant 0 : index
    %c0_0 = arith.constant 0 : index
    %0 = vector.load %arg1[%c0, %c0_0] : memref<64x32xbf16, #tpu.memory_space<vmem>>, vector<64x32xbf16>
    %c0_1 = arith.constant 0 : index
    %c0_2 = arith.constant 0 : index
    %c0_3 = arith.constant 0 : index
    %1 = vector.load %arg3[%c0_1, %c0_2, %c0_3] : memref<1x32x16xf32, #tpu.memory_space<vmem>>, vector<1x32x16xf32>
    %2 = vector.shape_cast %1 : vector<1x32x16xf32> to vector<32x16xf32>
    %3 = arith.truncf %2 : vector<32x16xf32> to vector<32x16xbf16>
    %cst = arith.constant dense<0.000000e+00> : vector<64x16xf32>
    %4 = tpu.matmul %0, %3, %cst {dimension_numbers = #tpu.dot_dimension_numbers<[1], [0], [0], [1], [0, 0, 1, 1], [], []>} : vector<64x32xbf16>, vector<32x16xbf16>, vector<64x16xf32> -> vector<64x16xf32>
    %5 = vector.extract_strided_slice %4 {offsets = [0, 0], sizes = [32, 16], strides = [1, 1]} : vector<64x16xf32> to vector<32x16xf32>
    %6 = vector.extract_strided_slice %4 {offsets = [32, 0], sizes = [32, 16], strides = [1, 1]} : vector<64x16xf32> to vector<32x16xf32>
    %7 = tpu.concatenate %5, %6 in 1 : vector<32x16xf32>, vector<32x16xf32> -> vector<32x32xf32>
    %c0_4 = arith.constant 0 : index
    %c0_5 = arith.constant 0 : index
    %8 = vector.load %arg2[%c0_4, %c0_5] : memref<200x16xf32, #tpu.memory_space<vmem>>, vector<32x16xf32>
    %c192 = arith.constant 192 : index
    %c0_6 = arith.constant 0 : index
    %9 = vector.load %arg2[%c192, %c0_6] : memref<200x16xf32, #tpu.memory_space<vmem>>, vector<1x16xf32>
    %10 = arith.truncf %7 : vector<32x32xf32> to vector<32x32xbf16>
    %11 = arith.truncf %8 : vector<32x16xf32> to vector<32x16xbf16>
    %cst_7 = arith.constant dense<0.000000e+00> : vector<32x16xf32>
    %12 = tpu.matmul %10, %11, %cst_7 {dimension_numbers = #tpu.dot_dimension_numbers<[1], [0], [0], [1], [0, 0, 1, 1], [], []>} : vector<32x32xbf16>, vector<32x16xbf16>, vector<32x16xf32> -> vector<32x16xf32>
    %13 = vector.broadcast %9 : vector<1x16xf32> to vector<32x16xf32>
    %14 = arith.addf %12, %13 : vector<32x16xf32>
    %cst_8 = arith.constant 0.000000e+00 : f32
    %15 = vector.broadcast %cst_8 : f32 to vector<32x16xf32>
    %16 = arith.maximumf %14, %15 : vector<32x16xf32>
    %17 = arith.truncf %16 : vector<32x16xf32> to vector<32x16xbf16>
    %cst_9 = arith.constant dense<0.000000e+00> : vector<64x16xf32>
    %18 = tpu.matmul %0, %17, %cst_9 {dimension_numbers = #tpu.dot_dimension_numbers<[1], [0], [0], [1], [0, 0, 1, 1], [], []>} : vector<64x32xbf16>, vector<32x16xbf16>, vector<64x16xf32> -> vector<64x16xf32>
    %19 = vector.extract_strided_slice %18 {offsets = [0, 0], sizes = [32, 16], strides = [1, 1]} : vector<64x16xf32> to vector<32x16xf32>
    %20 = vector.extract_strided_slice %18 {offsets = [32, 0], sizes = [32, 16], strides = [1, 1]} : vector<64x16xf32> to vector<32x16xf32>
    %21 = tpu.concatenate %19, %20 in 1 : vector<32x16xf32>, vector<32x16xf32> -> vector<32x32xf32>
    %c32 = arith.constant 32 : index
    %c0_10 = arith.constant 0 : index
    %22 = vector.load %arg2[%c32, %c0_10] : memref<200x16xf32, #tpu.memory_space<vmem>>, vector<32x16xf32>
    %c193 = arith.constant 193 : index
    %c0_11 = arith.constant 0 : index
    %23 = vector.load %arg2[%c193, %c0_11] : memref<200x16xf32, #tpu.memory_space<vmem>>, vector<1x16xf32>
    %24 = arith.truncf %21 : vector<32x32xf32> to vector<32x32xbf16>
    %25 = arith.truncf %22 : vector<32x16xf32> to vector<32x16xbf16>
    %cst_12 = arith.constant dense<0.000000e+00> : vector<32x16xf32>
    %26 = tpu.matmul %24, %25, %cst_12 {dimension_numbers = #tpu.dot_dimension_numbers<[1], [0], [0], [1], [0, 0, 1, 1], [], []>} : vector<32x32xbf16>, vector<32x16xbf16>, vector<32x16xf32> -> vector<32x16xf32>
    %27 = vector.broadcast %23 : vector<1x16xf32> to vector<32x16xf32>
    %28 = arith.addf %26, %27 : vector<32x16xf32>
    %cst_13 = arith.constant 0.000000e+00 : f32
    %29 = vector.broadcast %cst_13 : f32 to vector<32x16xf32>
    %30 = arith.maximumf %28, %29 : vector<32x16xf32>
    %31 = arith.addf %16, %30 : vector<32x16xf32>
    %32 = arith.truncf %31 : vector<32x16xf32> to vector<32x16xbf16>
    %cst_14 = arith.constant dense<0.000000e+00> : vector<64x16xf32>
    %33 = tpu.matmul %0, %32, %cst_14 {dimension_numbers = #tpu.dot_dimension_numbers<[1], [0], [0], [1], [0, 0, 1, 1], [], []>} : vector<64x32xbf16>, vector<32x16xbf16>, vector<64x16xf32> -> vector<64x16xf32>
    %34 = vector.extract_strided_slice %33 {offsets = [0, 0], sizes = [32, 16], strides = [1, 1]} : vector<64x16xf32> to vector<32x16xf32>
    %35 = vector.extract_strided_slice %33 {offsets = [32, 0], sizes = [32, 16], strides = [1, 1]} : vector<64x16xf32> to vector<32x16xf32>
    %36 = tpu.concatenate %34, %35 in 1 : vector<32x16xf32>, vector<32x16xf32> -> vector<32x32xf32>
    %c64 = arith.constant 64 : index
    %c0_15 = arith.constant 0 : index
    %37 = vector.load %arg2[%c64, %c0_15] : memref<200x16xf32, #tpu.memory_space<vmem>>, vector<32x16xf32>
    %c194 = arith.constant 194 : index
    %c0_16 = arith.constant 0 : index
    %38 = vector.load %arg2[%c194, %c0_16] : memref<200x16xf32, #tpu.memory_space<vmem>>, vector<1x16xf32>
    %39 = arith.truncf %36 : vector<32x32xf32> to vector<32x32xbf16>
    %40 = arith.truncf %37 : vector<32x16xf32> to vector<32x16xbf16>
    %cst_17 = arith.constant dense<0.000000e+00> : vector<32x16xf32>
    %41 = tpu.matmul %39, %40, %cst_17 {dimension_numbers = #tpu.dot_dimension_numbers<[1], [0], [0], [1], [0, 0, 1, 1], [], []>} : vector<32x32xbf16>, vector<32x16xbf16>, vector<32x16xf32> -> vector<32x16xf32>
    %42 = vector.broadcast %38 : vector<1x16xf32> to vector<32x16xf32>
    %43 = arith.addf %41, %42 : vector<32x16xf32>
    %cst_18 = arith.constant 0.000000e+00 : f32
    %44 = vector.broadcast %cst_18 : f32 to vector<32x16xf32>
    %45 = arith.maximumf %43, %44 : vector<32x16xf32>
    %46 = arith.truncf %45 : vector<32x16xf32> to vector<32x16xbf16>
    %cst_19 = arith.constant dense<0.000000e+00> : vector<64x16xf32>
    %47 = tpu.matmul %0, %46, %cst_19 {dimension_numbers = #tpu.dot_dimension_numbers<[1], [0], [0], [1], [0, 0, 1, 1], [], []>} : vector<64x32xbf16>, vector<32x16xbf16>, vector<64x16xf32> -> vector<64x16xf32>
    %48 = vector.extract_strided_slice %47 {offsets = [0, 0], sizes = [32, 16], strides = [1, 1]} : vector<64x16xf32> to vector<32x16xf32>
    %49 = vector.extract_strided_slice %47 {offsets = [32, 0], sizes = [32, 16], strides = [1, 1]} : vector<64x16xf32> to vector<32x16xf32>
    %50 = tpu.concatenate %48, %49 in 1 : vector<32x16xf32>, vector<32x16xf32> -> vector<32x32xf32>
    %c96 = arith.constant 96 : index
    %c0_20 = arith.constant 0 : index
    %51 = vector.load %arg2[%c96, %c0_20] : memref<200x16xf32, #tpu.memory_space<vmem>>, vector<32x16xf32>
    %c195 = arith.constant 195 : index
    %c0_21 = arith.constant 0 : index
    %52 = vector.load %arg2[%c195, %c0_21] : memref<200x16xf32, #tpu.memory_space<vmem>>, vector<1x16xf32>
    %53 = arith.truncf %50 : vector<32x32xf32> to vector<32x32xbf16>
    %54 = arith.truncf %51 : vector<32x16xf32> to vector<32x16xbf16>
    %cst_22 = arith.constant dense<0.000000e+00> : vector<32x16xf32>
    %55 = tpu.matmul %53, %54, %cst_22 {dimension_numbers = #tpu.dot_dimension_numbers<[1], [0], [0], [1], [0, 0, 1, 1], [], []>} : vector<32x32xbf16>, vector<32x16xbf16>, vector<32x16xf32> -> vector<32x16xf32>
    %56 = vector.broadcast %52 : vector<1x16xf32> to vector<32x16xf32>
    %57 = arith.addf %55, %56 : vector<32x16xf32>
    %cst_23 = arith.constant 0.000000e+00 : f32
    %58 = vector.broadcast %cst_23 : f32 to vector<32x16xf32>
    %59 = arith.maximumf %57, %58 : vector<32x16xf32>
    %60 = arith.addf %45, %59 : vector<32x16xf32>
    %61 = arith.addf %31, %60 : vector<32x16xf32>
    %62 = arith.truncf %61 : vector<32x16xf32> to vector<32x16xbf16>
    %cst_24 = arith.constant dense<0.000000e+00> : vector<64x16xf32>
    %63 = tpu.matmul %0, %62, %cst_24 {dimension_numbers = #tpu.dot_dimension_numbers<[1], [0], [0], [1], [0, 0, 1, 1], [], []>} : vector<64x32xbf16>, vector<32x16xbf16>, vector<64x16xf32> -> vector<64x16xf32>
    %64 = vector.extract_strided_slice %63 {offsets = [0, 0], sizes = [32, 16], strides = [1, 1]} : vector<64x16xf32> to vector<32x16xf32>
    %65 = vector.extract_strided_slice %63 {offsets = [32, 0], sizes = [32, 16], strides = [1, 1]} : vector<64x16xf32> to vector<32x16xf32>
    %66 = tpu.concatenate %64, %65 in 1 : vector<32x16xf32>, vector<32x16xf32> -> vector<32x32xf32>
    %c128 = arith.constant 128 : index
    %c0_25 = arith.constant 0 : index
    %67 = vector.load %arg2[%c128, %c0_25] : memref<200x16xf32, #tpu.memory_space<vmem>>, vector<32x16xf32>
    %c196 = arith.constant 196 : index
    %c0_26 = arith.constant 0 : index
    %68 = vector.load %arg2[%c196, %c0_26] : memref<200x16xf32, #tpu.memory_space<vmem>>, vector<1x16xf32>
    %69 = arith.truncf %66 : vector<32x32xf32> to vector<32x32xbf16>
    %70 = arith.truncf %67 : vector<32x16xf32> to vector<32x16xbf16>
    %cst_27 = arith.constant dense<0.000000e+00> : vector<32x16xf32>
    %71 = tpu.matmul %69, %70, %cst_27 {dimension_numbers = #tpu.dot_dimension_numbers<[1], [0], [0], [1], [0, 0, 1, 1], [], []>} : vector<32x32xbf16>, vector<32x16xbf16>, vector<32x16xf32> -> vector<32x16xf32>
    %72 = vector.broadcast %68 : vector<1x16xf32> to vector<32x16xf32>
    %73 = arith.addf %71, %72 : vector<32x16xf32>
    %cst_28 = arith.constant 0.000000e+00 : f32
    %74 = vector.broadcast %cst_28 : f32 to vector<32x16xf32>
    %75 = arith.maximumf %73, %74 : vector<32x16xf32>
    %76 = arith.truncf %75 : vector<32x16xf32> to vector<32x16xbf16>
    %cst_29 = arith.constant dense<0.000000e+00> : vector<64x16xf32>
    %77 = tpu.matmul %0, %76, %cst_29 {dimension_numbers = #tpu.dot_dimension_numbers<[1], [0], [0], [1], [0, 0, 1, 1], [], []>} : vector<64x32xbf16>, vector<32x16xbf16>, vector<64x16xf32> -> vector<64x16xf32>
    %78 = vector.extract_strided_slice %77 {offsets = [0, 0], sizes = [32, 16], strides = [1, 1]} : vector<64x16xf32> to vector<32x16xf32>
    %79 = vector.extract_strided_slice %77 {offsets = [32, 0], sizes = [32, 16], strides = [1, 1]} : vector<64x16xf32> to vector<32x16xf32>
    %80 = tpu.concatenate %78, %79 in 1 : vector<32x16xf32>, vector<32x16xf32> -> vector<32x32xf32>
    %c160 = arith.constant 160 : index
    %c0_30 = arith.constant 0 : index
    %81 = vector.load %arg2[%c160, %c0_30] : memref<200x16xf32, #tpu.memory_space<vmem>>, vector<32x16xf32>
    %c197 = arith.constant 197 : index
    %c0_31 = arith.constant 0 : index
    %82 = vector.load %arg2[%c197, %c0_31] : memref<200x16xf32, #tpu.memory_space<vmem>>, vector<1x16xf32>
    %83 = arith.truncf %80 : vector<32x32xf32> to vector<32x32xbf16>
    %84 = arith.truncf %81 : vector<32x16xf32> to vector<32x16xbf16>
    %cst_32 = arith.constant dense<0.000000e+00> : vector<32x16xf32>
    %85 = tpu.matmul %83, %84, %cst_32 {dimension_numbers = #tpu.dot_dimension_numbers<[1], [0], [0], [1], [0, 0, 1, 1], [], []>} : vector<32x32xbf16>, vector<32x16xbf16>, vector<32x16xf32> -> vector<32x16xf32>
    %86 = vector.broadcast %82 : vector<1x16xf32> to vector<32x16xf32>
    %87 = arith.addf %85, %86 : vector<32x16xf32>
    %cst_33 = arith.constant 0.000000e+00 : f32
    %88 = vector.broadcast %cst_33 : f32 to vector<32x16xf32>
    %89 = arith.maximumf %87, %88 : vector<32x16xf32>
    %90 = arith.addf %75, %89 : vector<32x16xf32>
    %91 = vector.extract_strided_slice %90 {offsets = [0, 0], sizes = [32, 8], strides = [1, 1]} : vector<32x16xf32> to vector<32x8xf32>
    %c0_34 = arith.constant 0 : index
    %c0_35 = arith.constant 0 : index
    %c0_36 = arith.constant 0 : index
    %92 = vector.load %arg4[%c0_34, %c0_35, %c0_36] : memref<1x32x8xf32, #tpu.memory_space<vmem>>, vector<1x32x8xf32>
    %93 = vector.shape_cast %92 : vector<1x32x8xf32> to vector<32x8xf32>
    %94 = vector.shape_cast %91 : vector<32x8xf32> to vector<1x32x8xf32>
    tpu.vector_store %arg4[%c0_34, %c0_35, %c0_36], %94 {strides = array<i32>} : memref<1x32x8xf32, #tpu.memory_space<vmem>>, vector<1x32x8xf32>,
    return
  }
  func.func @transform_0(%arg0: i32) -> (i32, i32) {
    %c0_i32 = arith.constant 0 : i32
    %c0_i32_0 = arith.constant 0 : i32
    %c0_i32_1 = arith.constant 0 : i32
    return %c0_i32, %c0_i32_0 : i32, i32
  }
  func.func @transform_1(%arg0: i32) -> (i32, i32) {
    %c0_i32 = arith.constant 0 : i32
    %c0_i32_0 = arith.constant 0 : i32
    %c0_i32_1 = arith.constant 0 : i32
    return %c0_i32, %c0_i32_0 : i32, i32
  }
  func.func @transform_2(%arg0: i32) -> (i32, i32, i32) {
    %c0_i32 = arith.constant 0 : i32
    %c0_i32_0 = arith.constant 0 : i32
    %c0_i32_1 = arith.constant 0 : i32
    return %arg0, %c0_i32, %c0_i32_0 : i32, i32, i32
  }
  func.func @transform_3(%arg0: i32) -> (i32, i32, i32) {
    %c0_i32 = arith.constant 0 : i32
    %c0_i32_0 = arith.constant 0 : i32
    %c0_i32_1 = arith.constant 0 : i32
    return %arg0, %c0_i32, %c0_i32_0 : i32, i32, i32
  }
}

</mosaic_0001>

<llo_original>
// kernel: feature_extraction_module.1
$region0: #{feature_extraction_module.1}
  #allocation0 [shape = 'u32[]', space=smem, size = 0x4, offset = 0x4, fixed_abs, tag = 'smem constant byte address 0x4 - core index']
  #allocation1 [shape = 'u32[144,128]{1,0:T(1,128)}', space=vmem, size = 0x12000, scoped, tag = 'internal scratch']
  %s0 = inlined_call_operand.vmem [shape: bf16[64,32], index: 0, kind: input, shape index: {}]
  %s1 = inlined_call_operand.vmem [shape: f32[200,16], index: 1, kind: input, shape index: {}]
  %s2 = inlined_call_operand.vmem [shape: f32[4,32,16], index: 2, kind: input, shape index: {}]
  %s3 = inlined_call_operand.vmem [shape: f32[4,32,8], index: 3, kind: output, shape index: {}]
  %s4 = sld [smem:[#allocation0]]
  $region45: #{feature_extraction_module.1} parent=0
    _
  %s6 = ssub.s32 1, %s4
  %s7 = scalar_select 0, %s6, %s4
  loop: start=0, step=1, limit=6
  $region2: #{feature_extraction_module.1} parent=0 // loop_pre_header
    _
  $region3: #{feature_extraction_module.1} parent=0 // loop_header
    %s9 = sphi 0, %s13
    %p10 = scmp.ge.s32.totalorder %s9, 6
    %s17 = sphi 0, %s17
    %s19 = sphi 0, %s17
    %s20 = sphi 0, %s19
    %s34 = sphi 0, %s20
    %s38 = sphi 0, %s38
    %s40 = sphi 0, %s38
    %s41 = sphi 0, %s40
    %s55 = sphi 0, %s41
    %s61 = sphi 0, %s63
    %s64 = sphi 0, %s61
    %s65 = sphi 0, %s64
    %s81 = sphi 0, %s65
    %s87 = sphi 0, %s89
    %s90 = sphi 0, %s87
    %s91 = sphi 0, %s90
    %s107 = sphi 0, %s91
  $region4: #{feature_extraction_module.1} parent=0 // loop_header_branch
    %12 = sbr.rel (%p10) target = $region8
  $region5: #{feature_extraction_module.1} parent=0 // loop_body
    %s14 = ssub.s32 %s9, 1
    %s15 = ssub.s32 %s9, 2
    %s16 = sadd.s32 %s9, 1
    %s18 = sadd.s32 %s17, 1
    %p21 = scmp.eq.s32.totalorder %s9, 3
    %p22 = scmp.ne.s32.totalorder %s17, %s19
    %p23 = scmp.eq.s32.totalorder %s9, 0
    %p24 = por %p22, %p23
    %p25 = scmp.ne.s32.totalorder %s17, %s19
    %p26 = scmp.eq.s32.totalorder %s14, 3
    %p27 = por %p25, %p26
    %p28 = scmp.ne.s32.totalorder %s19, %s20
    %p29 = scmp.eq.s32.totalorder %s14, 0
    %p30 = por %p28, %p29
    %p31 = scmp.ne.s32.totalorder %s19, %s20
    %p32 = scmp.eq.s32.totalorder %s15, 3
    %p33 = por %p31, %p32
    %p35 = scmp.ne.s32.totalorder %s20, %s34
    %p36 = scmp.eq.s32.totalorder %s15, 0
    %p37 = por %p35, %p36
    %s39 = sadd.s32 %s38, 1
    %p42 = scmp.eq.s32.totalorder %s9, 3
    %p43 = scmp.ne.s32.totalorder %s38, %s40
    %p44 = scmp.eq.s32.totalorder %s9, 0
    %p45 = por %p43, %p44
    %p46 = scmp.ne.s32.totalorder %s38, %s40
    %p47 = scmp.eq.s32.totalorder %s14, 3
    %p48 = por %p46, %p47
    %p49 = scmp.ne.s32.totalorder %s40, %s41
    %p50 = scmp.eq.s32.totalorder %s14, 0
    %p51 = por %p49, %p50
    %p52 = scmp.ne.s32.totalorder %s40, %s41
    %p53 = scmp.eq.s32.totalorder %s15, 3
    %p54 = por %p52, %p53
    %p56 = scmp.ne.s32.totalorder %s41, %s55
    %p57 = scmp.eq.s32.totalorder %s15, 0
    %p58 = por %p56, %p57
    %s59 = ssub.s32 %s9, %s16
    %p60 = scmp.eq.s32.totalorder %s59, 0
    %s62 = sadd.s32 %s61, 1
    %s63 = scalar_select %p60, %s61, %s62
    %p66 = pneg %p60
    %p67 = scmp.eq.s32.totalorder %s9, 3
    %p68 = por %p66, %p67
    %p69 = scmp.ne.s32.totalorder %s61, %s64
    %p70 = scmp.eq.s32.totalorder %s9, 0
    %p71 = por %p69, %p70
    %p72 = scmp.ne.s32.totalorder %s61, %s64
    %p73 = scmp.eq.s32.totalorder %s14, 3
    %p74 = por %p72, %p73
    %p75 = scmp.ne.s32.totalorder %s64, %s65
    %p76 = scmp.eq.s32.totalorder %s14, 0
    %p77 = por %p75, %p76
    %p78 = scmp.ne.s32.totalorder %s64, %s65
    %p79 = scmp.eq.s32.totalorder %s15, 3
    %p80 = por %p78, %p79
    %p82 = scmp.ne.s32.totalorder %s65, %s81
    %p83 = scmp.eq.s32.totalorder %s15, 0
    %p84 = por %p82, %p83
    %s85 = ssub.s32 %s9, %s16
    %p86 = scmp.eq.s32.totalorder %s85, 0
    %s88 = sadd.s32 %s87, 1
    %s89 = scalar_select %p86, %s87, %s88
    %p92 = pneg %p86
    %p93 = scmp.eq.s32.totalorder %s9, 3
    %p94 = por %p92, %p93
    %p95 = scmp.ne.s32.totalorder %s87, %s90
    %p96 = scmp.eq.s32.totalorder %s9, 0
    %p97 = por %p95, %p96
    %p98 = scmp.ne.s32.totalorder %s87, %s90
    %p99 = scmp.eq.s32.totalorder %s14, 3
    %p100 = por %p98, %p99
    %p101 = scmp.ne.s32.totalorder %s90, %s91
    %p102 = scmp.eq.s32.totalorder %s14, 0
    %p103 = por %p101, %p102
    %p104 = scmp.ne.s32.totalorder %s90, %s91
    %p105 = scmp.eq.s32.totalorder %s15, 3
    %p106 = por %p104, %p105
    %p108 = scmp.ne.s32.totalorder %s91, %s107
    %p109 = scmp.eq.s32.totalorder %s15, 0
    %p110 = por %p108, %p109
    %p111 = scmp.le.s32.totalorder 1, %s9
    %p112 = scmp.lt.s32.totalorder %s9, 5
    %p113 = pnand %p111, %p112
    %p114 = pneg %p113
    // Predicated region
    $region9: #{feature_extraction_module.1} parent=5 // pred_check
      _
    $region10: #{feature_extraction_module.1} parent=5 // pred_check_branch
      %116 = sbr.rel (%p113) target = $region12
    $region11: #{feature_extraction_module.1} parent=5 // pred_region
      %s117 = ssub.s32 %s9, 1
      // Predicated region
      $region13: #{feature_extraction_module.1} parent=11 // pred_check
        %p118 = pneg %p30
      $region14: #{feature_extraction_module.1} parent=11 // pred_check_branch
        %120 = sbr.rel (%p118) target = $region16
      $region15: #{feature_extraction_module.1} parent=11 // pred_region
        _
      $region16: #{feature_extraction_module.1} parent=11 // pred_fallthru
        _
      // Predicated region
      $region17: #{feature_extraction_module.1} parent=11 // pred_check
        %p121 = pneg %p51
      $region18: #{feature_extraction_module.1} parent=11 // pred_check_branch
        %123 = sbr.rel (%p121) target = $region20
      $region19: #{feature_extraction_module.1} parent=11 // pred_region
        _
      $region20: #{feature_extraction_module.1} parent=11 // pred_fallthru
        _
    $region12: #{feature_extraction_module.1} parent=5 // pred_fallthru
      _
    %p124 = scmp.lt.s32.totalorder %s9, 4
    // Predicated region
    $region21: #{feature_extraction_module.1} parent=5 // pred_check
      %p125 = pneg %p124
    $region22: #{feature_extraction_module.1} parent=5 // pred_check_branch
      %127 = sbr.rel (%p125) target = $region24
    $region23: #{feature_extraction_module.1} parent=5 // pred_region
      // Predicated region
      $region25: #{feature_extraction_module.1} parent=23 // pred_check
        %p128 = pneg %p71
      $region26: #{feature_extraction_module.1} parent=23 // pred_check_branch
        %130 = sbr.rel (%p128) target = $region28
      $region27: #{feature_extraction_module.1} parent=23 // pred_region
        %p131 = scmp.lt.s32.totalorder %s9, 3
        %s132 = scalar_select %p131, %s9, 3
        %s133 = smul.addr %s132, 4
        %s134 = smul.addr %s133, 8
        %s135 = scalar_lea.vmem %s2, %s134
      $region28: #{feature_extraction_module.1} parent=23 // pred_fallthru
        _
    $region24: #{feature_extraction_module.1} parent=5 // pred_fallthru
      _
    %p136 = scmp.le.s32.totalorder 1, %s9
    %p137 = scmp.lt.s32.totalorder %s9, 5
    %p138 = pnand %p136, %p137
    %p139 = pneg %p138
    // Predicated region
    $region29: #{feature_extraction_module.1} parent=5 // pred_check
      _
    $region30: #{feature_extraction_module.1} parent=5 // pred_check_branch
      %141 = sbr.rel (%p138) target = $region32
    $region31: #{feature_extraction_module.1} parent=5 // pred_region
      %s142 = ssub.s32 %s9, 1
      %p143 = pneg %p30
      %p144 = pneg %p27
      %p145 = pneg %p51
      %p146 = pneg %p48
      %p147 = scmp.lt.s32.totalorder %s14, 3
      %s148 = scalar_select %p147, %s14, 3
      %s149 = smul.addr %s148, 4
      %s150 = smul.addr %s149, 8
      %s151 = scalar_lea.vmem %s2, %s150
      %p152 = pneg %p77
      %p153 = pneg %p74
      %p154 = pneg %p103
      %p155 = pneg %p100
      %p156 = scmp.lt.s32.totalorder %s14, 3
      %s157 = scalar_select %p156, %s14, 3
      %s158 = smul.addr %s157, 4
      %s159 = smul.addr %s158, 8
      %s160 = scalar_lea.vmem %s3, %s159
      %p161 = scmp.lt.s32.totalorder %s14, 3
      %s162 = scalar_select %p161, %s14, 3
      %s163 = smul.addr %s162, 4
      %s164 = smul.addr %s163, 8
      %s165 = scalar_lea.vmem %s2, %s164
      %p166 = scmp.lt.s32.totalorder %s14, 3
      %s167 = scalar_select %p166, %s14, 3
      %s168 = smul.addr %s167, 4
      %s169 = smul.addr %s168, 8
      %s170 = scalar_lea.vmem %s3, %s169
      %v172 = vld [vmem:[%s0] sm:$0xf]
      %v173 = vld [vmem:[%s0 + $0x4] sm:$0xf]
      %v174 = vld [vmem:[%s0 + $0x8] sm:$0xf]
      %v175 = vld [vmem:[%s0 + $0xc] sm:$0xf]
      %v176 = vld [vmem:[%s0 + $0x10] sm:$0xf]
      %v177 = vld [vmem:[%s0 + $0x14] sm:$0xf]
      %v178 = vld [vmem:[%s0 + $0x18] sm:$0xf]
      %v179 = vld [vmem:[%s0 + $0x1c] sm:$0xf]
      %v180 = vld [vmem:[%s165] sm:$0xff]
      %v181 = vld [vmem:[%s165 + $0x8] sm:$0xff]
      %v182 = vld [vmem:[%s165 + $0x10] sm:$0xff]
      %v183 = vld [vmem:[%s165 + $0x18] sm:$0xff]
      %v184 = vpack.c.bf16 %v181, %v180
      %v185 = vpack.c.bf16 %v183, %v182
      %v194 = vunpack.c.l.b16 %v172
      %v195 = vunpack.c.l.b16 %v173
      %v196 = vunpack.c.l.b16 %v174
      %v197 = vunpack.c.l.b16 %v175
      %v198 = vunpack.c.l.b16 %v176
      %v199 = vunpack.c.l.b16 %v177
      %v200 = vunpack.c.l.b16 %v178
      %v201 = vunpack.c.l.b16 %v179
      %v202 = vpack.c.b16 %v195, %v194
      %v203 = vpack.c.b16 %v197, %v196
      %v204 = vpack.c.b16 %v199, %v198
      %v205 = vpack.c.b16 %v201, %v200
      %vm206 = vcmask 261120
      %v208 = vsel %vm206, %v202, 0
      %v211 = vsel %vm206, %v203, 0
      %v214 = vsel %vm206, %v204, 0
      %v217 = vsel %vm206, %v205, 0
      %219 = vmatprep.subr.bf16.mxu0 0
      %220 = vmatpush1.bf16.msra.mxu0 0
      %221 = vmatprep.subr.bf16.mxu0 0
      %222 = vmatpush1.bf16.msra.mxu0 0
      %223 = vmatprep.subr.bf16.mxu0 0
      %224 = vmatpush1.bf16.msra.mxu0 0
      %225 = vmatprep.subr.bf16.mxu0 0
      %226 = vmatpush1.bf16.msra.mxu0 0
      %227 = vmatprep.subr.bf16.mxu0 0
      %228 = vmatpush1.bf16.msra.mxu0 0
      %229 = vmatprep.subr.bf16.mxu0 0
      %230 = vmatpush1.bf16.msra.mxu0 0
      %231 = vmatprep.subr.bf16.mxu0 0
      %232 = vmatpush1.bf16.msra.mxu0 %v185
      %233 = vmatprep.subr.bf16.mxu0 0
      %234 = vmatpush1.bf16.msra.mxu0 %v184
      %235 = vmatprep.subr.bf16.mxu0 0
      %236 = vmatpush2.bf16.msra.mxu0 0
      %237 = vmatprep.subr.bf16.mxu0 0
      %238 = vmatpush2.bf16.msra.mxu0 0
      %239 = vmatprep.subr.bf16.mxu0 0
      %240 = vmatpush2.bf16.msra.mxu0 0
      %241 = vmatprep.subr.bf16.mxu0 0
      %242 = vmatpush2.bf16.msra.mxu0 0
      %243 = vmatprep.subr.bf16.mxu0 0
      %244 = vmatpush2.bf16.msra.mxu0 0
      %245 = vmatprep.subr.bf16.mxu0 0
      %246 = vmatpush2.bf16.msra.mxu0 0
      %247 = vmatprep.subr.bf16.mxu0 0
      %248 = vmatpush2.bf16.msra.mxu0 0
      %249 = vmatprep.subr.bf16.mxu0 0
      %250 = vmatpush2.bf16.msra.mxu0 0
      %251 = vmatprep.mubr.bf16.mxu0 0
      %252 = vmatmul.mubr.bf16.gmra.mxu0 %v208
      %v253 = vpop.f32.mrf.mxu0
      %v254 = vadd.f32 0.0, %v253
      %v255 = vpop.f32.mrf.mxu0
      %v256 = vpop.f32.mrf.mxu0
      %v257 = vadd.f32 0.0, %v256
      %v258 = vpop.f32.mrf.mxu0
      %259 = vmatprep.mubr.bf16.mxu0 0
      %260 = vmatmul.mubr.bf16.gmra.mxu0 %v211
      %v261 = vpop.f32.mrf.mxu0
      %v262 = vadd.f32 0.0, %v261
      %v263 = vpop.f32.mrf.mxu0
      %v264 = vpop.f32.mrf.mxu0
      %v265 = vadd.f32 0.0, %v264
      %v266 = vpop.f32.mrf.mxu0
      %267 = vmatprep.mubr.bf16.mxu0 0
      %268 = vmatmul.mubr.bf16.gmra.mxu0 %v214
      %v269 = vpop.f32.mrf.mxu0
      %v270 = vadd.f32 0.0, %v269
      %v271 = vpop.f32.mrf.mxu0
      %v272 = vpop.f32.mrf.mxu0
      %v273 = vadd.f32 0.0, %v272
      %v274 = vpop.f32.mrf.mxu0
      %275 = vmatprep.mubr.bf16.mxu0 0
      %276 = vmatmul.mubr.bf16.gmra.mxu0 %v217
      %v277 = vpop.f32.mrf.mxu0
      %v278 = vadd.f32 0.0, %v277
      %v279 = vpop.f32.mrf.mxu0
      %v280 = vpop.f32.mrf.mxu0
      %v281 = vadd.f32 0.0, %v280
      %v282 = vpop.f32.mrf.mxu0
      %283 = vdwg.mxu0
      %288 = vrot.lane.b32.xlu0 %v270, 16
      %v289 = vpop.permute.xlu0 %288
      %290 = vrot.lane.b32.xlu0 %v273, 16
      %v291 = vpop.permute.xlu0 %290
      %292 = vrot.lane.b32.xlu0 %v278, 16
      %v293 = vpop.permute.xlu0 %292
      %294 = vrot.lane.b32.xlu0 %v281, 16
      %v295 = vpop.permute.xlu0 %294
      %vm300 = vcmask 130048
      %v301 = vsel %vm300, %v254, %v289
      %v302 = vsel %vm300, %v257, %v291
      %v303 = vsel %vm300, %v262, %v293
      %v304 = vsel %vm300, %v265, %v295
      %v305 = vld [vmem:[%s1] sm:$0xff]
      %v306 = vld [vmem:[%s1 + $0x8] sm:$0xff]
      %v307 = vld [vmem:[%s1 + $0x10] sm:$0xff]
      %v308 = vld [vmem:[%s1 + $0x18] sm:$0xff]
      %v309 = vld [vmem:[%s1 + $0xc0] sm:$0x1]
      %v310 = vpack.c.bf16 %v302, %v301
      %v311 = vpack.c.bf16 %v304, %v303
      %v312 = vpack.c.bf16 %v306, %v305
      %v313 = vpack.c.bf16 %v308, %v307
      %v314 = vlaneseq
      %v315 = vshrl.u32 %v314, 7
      %v316 = vsub.s32 0, %v315
      %v317 = vrot.slane %v309, %v316
      %v319 = vsel %vm206, %v310, 0
      %v322 = vsel %vm206, %v311, 0
      %324 = vmatprep.subr.bf16.mxu0 0
      %325 = vmatpush1.bf16.msra.mxu0 0
      %326 = vmatprep.subr.bf16.mxu0 0
      %327 = vmatpush1.bf16.msra.mxu0 0
      %328 = vmatprep.subr.bf16.mxu0 0
      %329 = vmatpush1.bf16.msra.mxu0 0
      %330 = vmatprep.subr.bf16.mxu0 0
      %331 = vmatpush1.bf16.msra.mxu0 0
      %332 = vmatprep.subr.bf16.mxu0 0
      %333 = vmatpush1.bf16.msra.mxu0 0
      %334 = vmatprep.subr.bf16.mxu0 0
      %335 = vmatpush1.bf16.msra.mxu0 0
      %336 = vmatprep.subr.bf16.mxu0 0
      %337 = vmatpush1.bf16.msra.mxu0 %v313
      %338 = vmatprep.subr.bf16.mxu0 0
      %339 = vmatpush1.bf16.msra.mxu0 %v312
      %340 = vmatprep.subr.bf16.mxu0 0
      %341 = vmatpush2.bf16.msra.mxu0 0
      %342 = vmatprep.subr.bf16.mxu0 0
      %343 = vmatpush2.bf16.msra.mxu0 0
      %344 = vmatprep.subr.bf16.mxu0 0
      %345 = vmatpush2.bf16.msra.mxu0 0
      %346 = vmatprep.subr.bf16.mxu0 0
      %347 = vmatpush2.bf16.msra.mxu0 0
      %348 = vmatprep.subr.bf16.mxu0 0
      %349 = vmatpush2.bf16.msra.mxu0 0
      %350 = vmatprep.subr.bf16.mxu0 0
      %351 = vmatpush2.bf16.msra.mxu0 0
      %352 = vmatprep.subr.bf16.mxu0 0
      %353 = vmatpush2.bf16.msra.mxu0 0
      %354 = vmatprep.subr.bf16.mxu0 0
      %355 = vmatpush2.bf16.msra.mxu0 0
      %356 = vmatprep.mubr.bf16.mxu0 0
      %357 = vmatmul.mubr.bf16.gmra.mxu0 %v319
      %v358 = vpop.f32.mrf.mxu0
      %v359 = vadd.f32 %v317, %v358
      %v360 = vpop.f32.mrf.mxu0
      %v361 = vpop.f32.mrf.mxu0
      %v362 = vadd.f32 %v317, %v361
      %v363 = vpop.f32.mrf.mxu0
      %364 = vmatprep.mubr.bf16.mxu0 0
      %365 = vmatmul.mubr.bf16.gmra.mxu0 %v322
      %v366 = vpop.f32.mrf.mxu0
      %v367 = vadd.f32 %v317, %v366
      %v368 = vpop.f32.mrf.mxu0
      %v369 = vpop.f32.mrf.mxu0
      %v370 = vadd.f32 %v317, %v369
      %v371 = vpop.f32.mrf.mxu0
      %372 = vdwg.mxu0
      %v373 = vmax.f32 %v359, 0.0
      %v374 = vmax.f32 %v362, 0.0
      %v375 = vmax.f32 %v367, 0.0
      %v376 = vmax.f32 %v370, 0.0
      %v377 = vpack.c.bf16 %v374, %v373
      %v378 = vpack.c.bf16 %v376, %v375
      %379 = vmatprep.subr.bf16.mxu0 0
      %380 = vmatpush1.bf16.msra.mxu0 0
      %381 = vmatprep.subr.bf16.mxu0 0
      %382 = vmatpush1.bf16.msra.mxu0 0
      %383 = vmatprep.subr.bf16.mxu0 0
      %384 = vmatpush1.bf16.msra.mxu0 0
      %385 = vmatprep.subr.bf16.mxu0 0
      %386 = vmatpush1.bf16.msra.mxu0 0
      %387 = vmatprep.subr.bf16.mxu0 0
      %388 = vmatpush1.bf16.msra.mxu0 0
      %389 = vmatprep.subr.bf16.mxu0 0
      %390 = vmatpush1.bf16.msra.mxu0 0
      %391 = vmatprep.subr.bf16.mxu0 0
      %392 = vmatpush1.bf16.msra.mxu0 %v378
      %393 = vmatprep.subr.bf16.mxu0 0
      %394 = vmatpush1.bf16.msra.mxu0 %v377
      %395 = vmatprep.subr.bf16.mxu0 0
      %396 = vmatpush2.bf16.msra.mxu0 0
      %397 = vmatprep.subr.bf16.mxu0 0
      %398 = vmatpush2.bf16.msra.mxu0 0
      %399 = vmatprep.subr.bf16.mxu0 0
      %400 = vmatpush2.bf16.msra.mxu0 0
      %401 = vmatprep.subr.bf16.mxu0 0
      %402 = vmatpush2.bf16.msra.mxu0 0
      %403 = vmatprep.subr.bf16.mxu0 0
      %404 = vmatpush2.bf16.msra.mxu0 0
      %405 = vmatprep.subr.bf16.mxu0 0
      %406 = vmatpush2.bf16.msra.mxu0 0
      %407 = vmatprep.subr.bf16.mxu0 0
      %408 = vmatpush2.bf16.msra.mxu0 0
      %409 = vmatprep.subr.bf16.mxu0 0
      %410 = vmatpush2.bf16.msra.mxu0 0
      %411 = vmatprep.mubr.bf16.mxu0 0
      %412 = vmatmul.mubr.bf16.gmra.mxu0 %v208
      %v413 = vpop.f32.mrf.mxu0
      %v414 = vadd.f32 0.0, %v413
      %v415 = vpop.f32.mrf.mxu0
      %v416 = vpop.f32.mrf.mxu0
      %v417 = vadd.f32 0.0, %v416
      %v418 = vpop.f32.mrf.mxu0
      %419 = vmatprep.mubr.bf16.mxu0 0
      %420 = vmatmul.mubr.bf16.gmra.mxu0 %v211
      %v421 = vpop.f32.mrf.mxu0
      %v422 = vadd.f32 0.0, %v421
      %v423 = vpop.f32.mrf.mxu0
      %v424 = vpop.f32.mrf.mxu0
      %v425 = vadd.f32 0.0, %v424
      %v426 = vpop.f32.mrf.mxu0
      %427 = vmatprep.mubr.bf16.mxu0 0
      %428 = vmatmul.mubr.bf16.gmra.mxu0 %v214
      %v429 = vpop.f32.mrf.mxu0
      %v430 = vadd.f32 0.0, %v429
      %v431 = vpop.f32.mrf.mxu0
      %v432 = vpop.f32.mrf.mxu0
      %v433 = vadd.f32 0.0, %v432
      %v434 = vpop.f32.mrf.mxu0
      %435 = vmatprep.mubr.bf16.mxu0 0
      %436 = vmatmul.mubr.bf16.gmra.mxu0 %v217
      %v437 = vpop.f32.mrf.mxu0
      %v438 = vadd.f32 0.0, %v437
      %v439 = vpop.f32.mrf.mxu0
      %v440 = vpop.f32.mrf.mxu0
      %v441 = vadd.f32 0.0, %v440
      %v442 = vpop.f32.mrf.mxu0
      %443 = vdwg.mxu0
      %448 = vrot.lane.b32.xlu0 %v430, 16
      %v449 = vpop.permute.xlu0 %448
      %450 = vrot.lane.b32.xlu0 %v433, 16
      %v451 = vpop.permute.xlu0 %450
      %452 = vrot.lane.b32.xlu0 %v438, 16
      %v453 = vpop.permute.xlu0 %452
      %454 = vrot.lane.b32.xlu0 %v441, 16
      %v455 = vpop.permute.xlu0 %454
      %v460 = vsel %vm300, %v414, %v449
      %v461 = vsel %vm300, %v417, %v451
      %v462 = vsel %vm300, %v422, %v453
      %v463 = vsel %vm300, %v425, %v455
      %v464 = vld [vmem:[%s1 + $0x20] sm:$0xff]
      %v465 = vld [vmem:[%s1 + $0x28] sm:$0xff]
      %v466 = vld [vmem:[%s1 + $0x30] sm:$0xff]
      %v467 = vld [vmem:[%s1 + $0x38] sm:$0xff]
      %v468 = vld [vmem:[%s1 + $0xc1] sm:$0x1]
      %v469 = vpack.c.bf16 %v461, %v460
      %v470 = vpack.c.bf16 %v463, %v462
      %v471 = vpack.c.bf16 %v465, %v464
      %v472 = vpack.c.bf16 %v467, %v466
      %v473 = vlaneseq
      %v474 = vshrl.u32 %v473, 7
      %v475 = vsub.s32 0, %v474
      %v476 = vrot.slane %v468, %v475
      %v478 = vsel %vm206, %v469, 0
      %v481 = vsel %vm206, %v470, 0
      %483 = vmatprep.subr.bf16.mxu0 0
      %484 = vmatpush1.bf16.msra.mxu0 0
      %485 = vmatprep.subr.bf16.mxu0 0
      %486 = vmatpush1.bf16.msra.mxu0 0
      %487 = vmatprep.subr.bf16.mxu0 0
      %488 = vmatpush1.bf16.msra.mxu0 0
      %489 = vmatprep.subr.bf16.mxu0 0
      %490 = vmatpush1.bf16.msra.mxu0 0
      %491 = vmatprep.subr.bf16.mxu0 0
      %492 = vmatpush1.bf16.msra.mxu0 0
      %493 = vmatprep.subr.bf16.mxu0 0
      %494 = vmatpush1.bf16.msra.mxu0 0
      %495 = vmatprep.subr.bf16.mxu0 0
      %496 = vmatpush1.bf16.msra.mxu0 %v472
      %497 = vmatprep.subr.bf16.mxu0 0
      %498 = vmatpush1.bf16.msra.mxu0 %v471
      %499 = vmatprep.subr.bf16.mxu0 0
      %500 = vmatpush2.bf16.msra.mxu0 0
      %501 = vmatprep.subr.bf16.mxu0 0
      %502 = vmatpush2.bf16.msra.mxu0 0
      %503 = vmatprep.subr.bf16.mxu0 0
      %504 = vmatpush2.bf16.msra.mxu0 0
      %505 = vmatprep.subr.bf16.mxu0 0
      %506 = vmatpush2.bf16.msra.mxu0 0
      %507 = vmatprep.subr.bf16.mxu0 0
      %508 = vmatpush2.bf16.msra.mxu0 0
      %509 = vmatprep.subr.bf16.mxu0 0
      %510 = vmatpush2.bf16.msra.mxu0 0
      %511 = vmatprep.subr.bf16.mxu0 0
      %512 = vmatpush2.bf16.msra.mxu0 0
      %513 = vmatprep.subr.bf16.mxu0 0
      %514 = vmatpush2.bf16.msra.mxu0 0
      %515 = vmatprep.mubr.bf16.mxu0 0
      %516 = vmatmul.mubr.bf16.gmra.mxu0 %v478
      %v517 = vpop.f32.mrf.mxu0
      %v518 = vadd.f32 %v476, %v517
      %v519 = vpop.f32.mrf.mxu0
      %v520 = vpop.f32.mrf.mxu0
      %v521 = vadd.f32 %v476, %v520
      %v522 = vpop.f32.mrf.mxu0
      %523 = vmatprep.mubr.bf16.mxu0 0
      %524 = vmatmul.mubr.bf16.gmra.mxu0 %v481
      %v525 = vpop.f32.mrf.mxu0
      %v526 = vadd.f32 %v476, %v525
      %v527 = vpop.f32.mrf.mxu0
      %v528 = vpop.f32.mrf.mxu0
      %v529 = vadd.f32 %v476, %v528
      %v530 = vpop.f32.mrf.mxu0
      %531 = vdwg.mxu0
      %v532 = vmax.f32 %v518, 0.0
      %v533 = vmax.f32 %v521, 0.0
      %v534 = vmax.f32 %v526, 0.0
      %v535 = vmax.f32 %v529, 0.0
      %v536 = vadd.f32 %v373, %v532
      %v537 = vadd.f32 %v374, %v533
      %v538 = vadd.f32 %v375, %v534
      %v539 = vadd.f32 %v376, %v535
      %v540 = vpack.c.bf16 %v537, %v536
      %v541 = vpack.c.bf16 %v539, %v538
      %542 = vmatprep.subr.bf16.mxu0 0
      %543 = vmatpush1.bf16.msra.mxu0 0
      %544 = vmatprep.subr.bf16.mxu0 0
      %545 = vmatpush1.bf16.msra.mxu0 0
      %546 = vmatprep.subr.bf16.mxu0 0
      %547 = vmatpush1.bf16.msra.mxu0 0
      %548 = vmatprep.subr.bf16.mxu0 0
      %549 = vmatpush1.bf16.msra.mxu0 0
      %550 = vmatprep.subr.bf16.mxu0 0
      %551 = vmatpush1.bf16.msra.mxu0 0
      %552 = vmatprep.subr.bf16.mxu0 0
      %553 = vmatpush1.bf16.msra.mxu0 0
      %554 = vmatprep.subr.bf16.mxu0 0
      %555 = vmatpush1.bf16.msra.mxu0 %v541
      %556 = vmatprep.subr.bf16.mxu0 0
      %557 = vmatpush1.bf16.msra.mxu0 %v540
      %558 = vmatprep.subr.bf16.mxu0 0
      %559 = vmatpush2.bf16.msra.mxu0 0
      %560 = vmatprep.subr.bf16.mxu0 0
      %561 = vmatpush2.bf16.msra.mxu0 0
      %562 = vmatprep.subr.bf16.mxu0 0
      %563 = vmatpush2.bf16.msra.mxu0 0
      %564 = vmatprep.subr.bf16.mxu0 0
      %565 = vmatpush2.bf16.msra.mxu0 0
      %566 = vmatprep.subr.bf16.mxu0 0
      %567 = vmatpush2.bf16.msra.mxu0 0
      %568 = vmatprep.subr.bf16.mxu0 0
      %569 = vmatpush2.bf16.msra.mxu0 0
      %570 = vmatprep.subr.bf16.mxu0 0
      %571 = vmatpush2.bf16.msra.mxu0 0
      %572 = vmatprep.subr.bf16.mxu0 0
      %573 = vmatpush2.bf16.msra.mxu0 0
      %574 = vmatprep.mubr.bf16.mxu0 0
      %575 = vmatmul.mubr.bf16.gmra.mxu0 %v208
      %v576 = vpop.f32.mrf.mxu0
      %v577 = vadd.f32 0.0, %v576
      %v578 = vpop.f32.mrf.mxu0
      %v579 = vpop.f32.mrf.mxu0
      %v580 = vadd.f32 0.0, %v579
      %v581 = vpop.f32.mrf.mxu0
      %582 = vmatprep.mubr.bf16.mxu0 0
      %583 = vmatmul.mubr.bf16.gmra.mxu0 %v211
      %v584 = vpop.f32.mrf.mxu0
      %v585 = vadd.f32 0.0, %v584
      %v586 = vpop.f32.mrf.mxu0
      %v587 = vpop.f32.mrf.mxu0
      %v588 = vadd.f32 0.0, %v587
      %v589 = vpop.f32.mrf.mxu0
      %590 = vmatprep.mubr.bf16.mxu0 0
      %591 = vmatmul.mubr.bf16.gmra.mxu0 %v214
      %v592 = vpop.f32.mrf.mxu0
      %v593 = vadd.f32 0.0, %v592
      %v594 = vpop.f32.mrf.mxu0
      %v595 = vpop.f32.mrf.mxu0
      %v596 = vadd.f32 0.0, %v595
      %v597 = vpop.f32.mrf.mxu0
      %598 = vmatprep.mubr.bf16.mxu0 0
      %599 = vmatmul.mubr.bf16.gmra.mxu0 %v217
      %v600 = vpop.f32.mrf.mxu0
      %v601 = vadd.f32 0.0, %v600
      %v602 = vpop.f32.mrf.mxu0
      %v603 = vpop.f32.mrf.mxu0
      %v604 = vadd.f32 0.0, %v603
      %v605 = vpop.f32.mrf.mxu0
      %606 = vdwg.mxu0
      %611 = vrot.lane.b32.xlu0 %v593, 16
      %v612 = vpop.permute.xlu0 %611
      %613 = vrot.lane.b32.xlu0 %v596, 16
      %v614 = vpop.permute.xlu0 %613
      %615 = vrot.lane.b32.xlu0 %v601, 16
      %v616 = vpop.permute.xlu0 %615
      %617 = vrot.lane.b32.xlu0 %v604, 16
      %v618 = vpop.permute.xlu0 %617
      %v623 = vsel %vm300, %v577, %v612
      %v624 = vsel %vm300, %v580, %v614
      %v625 = vsel %vm300, %v585, %v616
      %v626 = vsel %vm300, %v588, %v618
      %v627 = vld [vmem:[%s1 + $0x40] sm:$0xff]
      %v628 = vld [vmem:[%s1 + $0x48] sm:$0xff]
      %v629 = vld [vmem:[%s1 + $0x50] sm:$0xff]
      %v630 = vld [vmem:[%s1 + $0x58] sm:$0xff]
      %v631 = vld [vmem:[%s1 + $0xc2] sm:$0x1]
      %v632 = vpack.c.bf16 %v624, %v623
      %v633 = vpack.c.bf16 %v626, %v625
      %v634 = vpack.c.bf16 %v628, %v627
      %v635 = vpack.c.bf16 %v630, %v629
      %v636 = vlaneseq
      %v637 = vshrl.u32 %v636, 7
      %v638 = vsub.s32 0, %v637
      %v639 = vrot.slane %v631, %v638
      %v641 = vsel %vm206, %v632, 0
      %v644 = vsel %vm206, %v633, 0
      %646 = vmatprep.subr.bf16.mxu0 0
      %647 = vmatpush1.bf16.msra.mxu0 0
      %648 = vmatprep.subr.bf16.mxu0 0
      %649 = vmatpush1.bf16.msra.mxu0 0
      %650 = vmatprep.subr.bf16.mxu0 0
      %651 = vmatpush1.bf16.msra.mxu0 0
      %652 = vmatprep.subr.bf16.mxu0 0
      %653 = vmatpush1.bf16.msra.mxu0 0
      %654 = vmatprep.subr.bf16.mxu0 0
      %655 = vmatpush1.bf16.msra.mxu0 0
      %656 = vmatprep.subr.bf16.mxu0 0
      %657 = vmatpush1.bf16.msra.mxu0 0
      %658 = vmatprep.subr.bf16.mxu0 0
      %659 = vmatpush1.bf16.msra.mxu0 %v635
      %660 = vmatprep.subr.bf16.mxu0 0
      %661 = vmatpush1.bf16.msra.mxu0 %v634
      %662 = vmatprep.subr.bf16.mxu0 0
      %663 = vmatpush2.bf16.msra.mxu0 0
      %664 = vmatprep.subr.bf16.mxu0 0
      %665 = vmatpush2.bf16.msra.mxu0 0
      %666 = vmatprep.subr.bf16.mxu0 0
      %667 = vmatpush2.bf16.msra.mxu0 0
      %668 = vmatprep.subr.bf16.mxu0 0
      %669 = vmatpush2.bf16.msra.mxu0 0
      %670 = vmatprep.subr.bf16.mxu0 0
      %671 = vmatpush2.bf16.msra.mxu0 0
      %672 = vmatprep.subr.bf16.mxu0 0
      %673 = vmatpush2.bf16.msra.mxu0 0
      %674 = vmatprep.subr.bf16.mxu0 0
      %675 = vmatpush2.bf16.msra.mxu0 0
      %676 = vmatprep.subr.bf16.mxu0 0
      %677 = vmatpush2.bf16.msra.mxu0 0
      %678 = vmatprep.mubr.bf16.mxu0 0
      %679 = vmatmul.mubr.bf16.gmra.mxu0 %v641
      %v680 = vpop.f32.mrf.mxu0
      %v681 = vadd.f32 %v639, %v680
      %v682 = vpop.f32.mrf.mxu0
      %v683 = vpop.f32.mrf.mxu0
      %v684 = vadd.f32 %v639, %v683
      %v685 = vpop.f32.mrf.mxu0
      %686 = vmatprep.mubr.bf16.mxu0 0
      %687 = vmatmul.mubr.bf16.gmra.mxu0 %v644
      %v688 = vpop.f32.mrf.mxu0
      %v689 = vadd.f32 %v639, %v688
      %v690 = vpop.f32.mrf.mxu0
      %v691 = vpop.f32.mrf.mxu0
      %v692 = vadd.f32 %v639, %v691
      %v693 = vpop.f32.mrf.mxu0
      %694 = vdwg.mxu0
      %v695 = vmax.f32 %v681, 0.0
      %v696 = vmax.f32 %v684, 0.0
      %v697 = vmax.f32 %v689, 0.0
      %v698 = vmax.f32 %v692, 0.0
      %v699 = vpack.c.bf16 %v696, %v695
      %v700 = vpack.c.bf16 %v698, %v697
      %701 = vmatprep.subr.bf16.mxu0 0
      %702 = vmatpush1.bf16.msra.mxu0 0
      %703 = vmatprep.subr.bf16.mxu0 0
      %704 = vmatpush1.bf16.msra.mxu0 0
      %705 = vmatprep.subr.bf16.mxu0 0
      %706 = vmatpush1.bf16.msra.mxu0 0
      %707 = vmatprep.subr.bf16.mxu0 0
      %708 = vmatpush1.bf16.msra.mxu0 0
      %709 = vmatprep.subr.bf16.mxu0 0
      %710 = vmatpush1.bf16.msra.mxu0 0
      %711 = vmatprep.subr.bf16.mxu0 0
      %712 = vmatpush1.bf16.msra.mxu0 0
      %713 = vmatprep.subr.bf16.mxu0 0
      %714 = vmatpush1.bf16.msra.mxu0 %v700
      %715 = vmatprep.subr.bf16.mxu0 0
      %716 = vmatpush1.bf16.msra.mxu0 %v699
      %717 = vmatprep.subr.bf16.mxu0 0
      %718 = vmatpush2.bf16.msra.mxu0 0
      %719 = vmatprep.subr.bf16.mxu0 0
      %720 = vmatpush2.bf16.msra.mxu0 0
      %721 = vmatprep.subr.bf16.mxu0 0
      %722 = vmatpush2.bf16.msra.mxu0 0
      %723 = vmatprep.subr.bf16.mxu0 0
      %724 = vmatpush2.bf16.msra.mxu0 0
      %725 = vmatprep.subr.bf16.mxu0 0
      %726 = vmatpush2.bf16.msra.mxu0 0
      %727 = vmatprep.subr.bf16.mxu0 0
      %728 = vmatpush2.bf16.msra.mxu0 0
      %729 = vmatprep.subr.bf16.mxu0 0
      %730 = vmatpush2.bf16.msra.mxu0 0
      %731 = vmatprep.subr.bf16.mxu0 0
      %732 = vmatpush2.bf16.msra.mxu0 0
      %733 = vmatprep.mubr.bf16.mxu0 0
      %734 = vmatmul.mubr.bf16.gmra.mxu0 %v208
      %v735 = vpop.f32.mrf.mxu0
      %v736 = vadd.f32 0.0, %v735
      %v737 = vpop.f32.mrf.mxu0
      %v738 = vpop.f32.mrf.mxu0
      %v739 = vadd.f32 0.0, %v738
      %v740 = vpop.f32.mrf.mxu0
      %741 = vmatprep.mubr.bf16.mxu0 0
      %742 = vmatmul.mubr.bf16.gmra.mxu0 %v211
      %v743 = vpop.f32.mrf.mxu0
      %v744 = vadd.f32 0.0, %v743
      %v745 = vpop.f32.mrf.mxu0
      %v746 = vpop.f32.mrf.mxu0
      %v747 = vadd.f32 0.0, %v746
      %v748 = vpop.f32.mrf.mxu0
      %749 = vmatprep.mubr.bf16.mxu0 0
      %750 = vmatmul.mubr.bf16.gmra.mxu0 %v214
      %v751 = vpop.f32.mrf.mxu0
      %v752 = vadd.f32 0.0, %v751
      %v753 = vpop.f32.mrf.mxu0
      %v754 = vpop.f32.mrf.mxu0
      %v755 = vadd.f32 0.0, %v754
      %v756 = vpop.f32.mrf.mxu0
      %757 = vmatprep.mubr.bf16.mxu0 0
      %758 = vmatmul.mubr.bf16.gmra.mxu0 %v217
      %v759 = vpop.f32.mrf.mxu0
      %v760 = vadd.f32 0.0, %v759
      %v761 = vpop.f32.mrf.mxu0
      %v762 = vpop.f32.mrf.mxu0
      %v763 = vadd.f32 0.0, %v762
      %v764 = vpop.f32.mrf.mxu0
      %765 = vdwg.mxu0
      %770 = vrot.lane.b32.xlu0 %v752, 16
      %v771 = vpop.permute.xlu0 %770
      %772 = vrot.lane.b32.xlu0 %v755, 16
      %v773 = vpop.permute.xlu0 %772
      %774 = vrot.lane.b32.xlu0 %v760, 16
      %v775 = vpop.permute.xlu0 %774
      %776 = vrot.lane.b32.xlu0 %v763, 16
      %v777 = vpop.permute.xlu0 %776
      %v782 = vsel %vm300, %v736, %v771
      %v783 = vsel %vm300, %v739, %v773
      %v784 = vsel %vm300, %v744, %v775
      %v785 = vsel %vm300, %v747, %v777
      %v786 = vld [vmem:[%s1 + $0x60] sm:$0xff]
      %v787 = vld [vmem:[%s1 + $0x68] sm:$0xff]
      %v788 = vld [vmem:[%s1 + $0x70] sm:$0xff]
      %v789 = vld [vmem:[%s1 + $0x78] sm:$0xff]
      %v790 = vld [vmem:[%s1 + $0xc3] sm:$0x1]
      %v791 = vpack.c.bf16 %v783, %v782
      %v792 = vpack.c.bf16 %v785, %v784
      %v793 = vpack.c.bf16 %v787, %v786
      %v794 = vpack.c.bf16 %v789, %v788
      %v795 = vlaneseq
      %v796 = vshrl.u32 %v795, 7
      %v797 = vsub.s32 0, %v796
      %v798 = vrot.slane %v790, %v797
      %v800 = vsel %vm206, %v791, 0
      %v803 = vsel %vm206, %v792, 0
      %805 = vmatprep.subr.bf16.mxu0 0
      %806 = vmatpush1.bf16.msra.mxu0 0
      %807 = vmatprep.subr.bf16.mxu0 0
      %808 = vmatpush1.bf16.msra.mxu0 0
      %809 = vmatprep.subr.bf16.mxu0 0
      %810 = vmatpush1.bf16.msra.mxu0 0
      %811 = vmatprep.subr.bf16.mxu0 0
      %812 = vmatpush1.bf16.msra.mxu0 0
      %813 = vmatprep.subr.bf16.mxu0 0
      %814 = vmatpush1.bf16.msra.mxu0 0
      %815 = vmatprep.subr.bf16.mxu0 0
      %816 = vmatpush1.bf16.msra.mxu0 0
      %817 = vmatprep.subr.bf16.mxu0 0
      %818 = vmatpush1.bf16.msra.mxu0 %v794
      %819 = vmatprep.subr.bf16.mxu0 0
      %820 = vmatpush1.bf16.msra.mxu0 %v793
      %821 = vmatprep.subr.bf16.mxu0 0
      %822 = vmatpush2.bf16.msra.mxu0 0
      %823 = vmatprep.subr.bf16.mxu0 0
      %824 = vmatpush2.bf16.msra.mxu0 0
      %825 = vmatprep.subr.bf16.mxu0 0
      %826 = vmatpush2.bf16.msra.mxu0 0
      %827 = vmatprep.subr.bf16.mxu0 0
      %828 = vmatpush2.bf16.msra.mxu0 0
      %829 = vmatprep.subr.bf16.mxu0 0
      %830 = vmatpush2.bf16.msra.mxu0 0
      %831 = vmatprep.subr.bf16.mxu0 0
      %832 = vmatpush2.bf16.msra.mxu0 0
      %833 = vmatprep.subr.bf16.mxu0 0
      %834 = vmatpush2.bf16.msra.mxu0 0
      %835 = vmatprep.subr.bf16.mxu0 0
      %836 = vmatpush2.bf16.msra.mxu0 0
      %837 = vmatprep.mubr.bf16.mxu0 0
      %838 = vmatmul.mubr.bf16.gmra.mxu0 %v800
      %v839 = vpop.f32.mrf.mxu0
      %v840 = vadd.f32 %v798, %v839
      %v841 = vpop.f32.mrf.mxu0
      %v842 = vpop.f32.mrf.mxu0
      %v843 = vadd.f32 %v798, %v842
      %v844 = vpop.f32.mrf.mxu0
      %845 = vmatprep.mubr.bf16.mxu0 0
      %846 = vmatmul.mubr.bf16.gmra.mxu0 %v803
      %v847 = vpop.f32.mrf.mxu0
      %v848 = vadd.f32 %v798, %v847
      %v849 = vpop.f32.mrf.mxu0
      %v850 = vpop.f32.mrf.mxu0
      %v851 = vadd.f32 %v798, %v850
      %v852 = vpop.f32.mrf.mxu0
      %853 = vdwg.mxu0
      %v854 = vmax.f32 %v840, 0.0
      %v855 = vmax.f32 %v843, 0.0
      %v856 = vmax.f32 %v848, 0.0
      %v857 = vmax.f32 %v851, 0.0
      %v858 = vadd.f32 %v695, %v854
      %v859 = vadd.f32 %v696, %v855
      %v860 = vadd.f32 %v697, %v856
      %v861 = vadd.f32 %v698, %v857
      %v862 = vadd.f32 %v536, %v858
      %v863 = vadd.f32 %v537, %v859
      %v864 = vadd.f32 %v538, %v860
      %v865 = vadd.f32 %v539, %v861
      %v866 = vpack.c.bf16 %v863, %v862
      %v867 = vpack.c.bf16 %v865, %v864
      %868 = vmatprep.subr.bf16.mxu0 0
      %869 = vmatpush1.bf16.msra.mxu0 0
      %870 = vmatprep.subr.bf16.mxu0 0
      %871 = vmatpush1.bf16.msra.mxu0 0
      %872 = vmatprep.subr.bf16.mxu0 0
      %873 = vmatpush1.bf16.msra.mxu0 0
      %874 = vmatprep.subr.bf16.mxu0 0
      %875 = vmatpush1.bf16.msra.mxu0 0
      %876 = vmatprep.subr.bf16.mxu0 0
      %877 = vmatpush1.bf16.msra.mxu0 0
      %878 = vmatprep.subr.bf16.mxu0 0
      %879 = vmatpush1.bf16.msra.mxu0 0
      %880 = vmatprep.subr.bf16.mxu0 0
      %881 = vmatpush1.bf16.msra.mxu0 %v867
      %882 = vmatprep.subr.bf16.mxu0 0
      %883 = vmatpush1.bf16.msra.mxu0 %v866
      %884 = vmatprep.subr.bf16.mxu0 0
      %885 = vmatpush2.bf16.msra.mxu0 0
      %886 = vmatprep.subr.bf16.mxu0 0
      %887 = vmatpush2.bf16.msra.mxu0 0
      %888 = vmatprep.subr.bf16.mxu0 0
      %889 = vmatpush2.bf16.msra.mxu0 0
      %890 = vmatprep.subr.bf16.mxu0 0
      %891 = vmatpush2.bf16.msra.mxu0 0
      %892 = vmatprep.subr.bf16.mxu0 0
      %893 = vmatpush2.bf16.msra.mxu0 0
      %894 = vmatprep.subr.bf16.mxu0 0
      %895 = vmatpush2.bf16.msra.mxu0 0
      %896 = vmatprep.subr.bf16.mxu0 0
      %897 = vmatpush2.bf16.msra.mxu0 0
      %898 = vmatprep.subr.bf16.mxu0 0
      %899 = vmatpush2.bf16.msra.mxu0 0
      %900 = vmatprep.mubr.bf16.mxu0 0
      %901 = vmatmul.mubr.bf16.gmra.mxu0 %v208
      %v902 = vpop.f32.mrf.mxu0
      %v903 = vadd.f32 0.0, %v902
      %v904 = vpop.f32.mrf.mxu0
      %v905 = vpop.f32.mrf.mxu0
      %v906 = vadd.f32 0.0, %v905
      %v907 = vpop.f32.mrf.mxu0
      %908 = vmatprep.mubr.bf16.mxu0 0
      %909 = vmatmul.mubr.bf16.gmra.mxu0 %v211
      %v910 = vpop.f32.mrf.mxu0
      %v911 = vadd.f32 0.0, %v910
      %v912 = vpop.f32.mrf.mxu0
      %v913 = vpop.f32.mrf.mxu0
      %v914 = vadd.f32 0.0, %v913
      %v915 = vpop.f32.mrf.mxu0
      %916 = vmatprep.mubr.bf16.mxu0 0
      %917 = vmatmul.mubr.bf16.gmra.mxu0 %v214
      %v918 = vpop.f32.mrf.mxu0
      %v919 = vadd.f32 0.0, %v918
      %v920 = vpop.f32.mrf.mxu0
      %v921 = vpop.f32.mrf.mxu0
      %v922 = vadd.f32 0.0, %v921
      %v923 = vpop.f32.mrf.mxu0
      %924 = vmatprep.mubr.bf16.mxu0 0
      %925 = vmatmul.mubr.bf16.gmra.mxu0 %v217
      %v926 = vpop.f32.mrf.mxu0
      %v927 = vadd.f32 0.0, %v926
      %v928 = vpop.f32.mrf.mxu0
      %v929 = vpop.f32.mrf.mxu0
      %v930 = vadd.f32 0.0, %v929
      %v931 = vpop.f32.mrf.mxu0
      %932 = vdwg.mxu0
      %937 = vrot.lane.b32.xlu0 %v919, 16
      %v938 = vpop.permute.xlu0 %937
      %939 = vrot.lane.b32.xlu0 %v922, 16
      %v940 = vpop.permute.xlu0 %939
      %941 = vrot.lane.b32.xlu0 %v927, 16
      %v942 = vpop.permute.xlu0 %941
      %943 = vrot.lane.b32.xlu0 %v930, 16
      %v944 = vpop.permute.xlu0 %943
      %v949 = vsel %vm300, %v903, %v938
      %v950 = vsel %vm300, %v906, %v940
      %v951 = vsel %vm300, %v911, %v942
      %v952 = vsel %vm300, %v914, %v944
      %v953 = vld [vmem:[%s1 + $0x80] sm:$0xff]
      %v954 = vld [vmem:[%s1 + $0x88] sm:$0xff]
      %v955 = vld [vmem:[%s1 + $0x90] sm:$0xff]
      %v956 = vld [vmem:[%s1 + $0x98] sm:$0xff]
      %v957 = vld [vmem:[%s1 + $0xc4] sm:$0x1]
      %v958 = vpack.c.bf16 %v950, %v949
      %v959 = vpack.c.bf16 %v952, %v951
      %v960 = vpack.c.bf16 %v954, %v953
      %v961 = vpack.c.bf16 %v956, %v955
      %v962 = vlaneseq
      %v963 = vshrl.u32 %v962, 7
      %v964 = vsub.s32 0, %v963
      %v965 = vrot.slane %v957, %v964
      %v967 = vsel %vm206, %v958, 0
      %v970 = vsel %vm206, %v959, 0
      %972 = vmatprep.subr.bf16.mxu0 0
      %973 = vmatpush1.bf16.msra.mxu0 0
      %974 = vmatprep.subr.bf16.mxu0 0
      %975 = vmatpush1.bf16.msra.mxu0 0
      %976 = vmatprep.subr.bf16.mxu0 0
      %977 = vmatpush1.bf16.msra.mxu0 0
      %978 = vmatprep.subr.bf16.mxu0 0
      %979 = vmatpush1.bf16.msra.mxu0 0
      %980 = vmatprep.subr.bf16.mxu0 0
      %981 = vmatpush1.bf16.msra.mxu0 0
      %982 = vmatprep.subr.bf16.mxu0 0
      %983 = vmatpush1.bf16.msra.mxu0 0
      %984 = vmatprep.subr.bf16.mxu0 0
      %985 = vmatpush1.bf16.msra.mxu0 %v961
      %986 = vmatprep.subr.bf16.mxu0 0
      %987 = vmatpush1.bf16.msra.mxu0 %v960
      %988 = vmatprep.subr.bf16.mxu0 0
      %989 = vmatpush2.bf16.msra.mxu0 0
      %990 = vmatprep.subr.bf16.mxu0 0
      %991 = vmatpush2.bf16.msra.mxu0 0
      %992 = vmatprep.subr.bf16.mxu0 0
      %993 = vmatpush2.bf16.msra.mxu0 0
      %994 = vmatprep.subr.bf16.mxu0 0
      %995 = vmatpush2.bf16.msra.mxu0 0
      %996 = vmatprep.subr.bf16.mxu0 0
      %997 = vmatpush2.bf16.msra.mxu0 0
      %998 = vmatprep.subr.bf16.mxu0 0
      %999 = vmatpush2.bf16.msra.mxu0 0
      %1000 = vmatprep.subr.bf16.mxu0 0
      %1001 = vmatpush2.bf16.msra.mxu0 0
      %1002 = vmatprep.subr.bf16.mxu0 0
      %1003 = vmatpush2.bf16.msra.mxu0 0
      %1004 = vmatprep.mubr.bf16.mxu0 0
      %1005 = vmatmul.mubr.bf16.gmra.mxu0 %v967
      %v1006 = vpop.f32.mrf.mxu0
      %v1007 = vadd.f32 %v965, %v1006
      %v1008 = vpop.f32.mrf.mxu0
      %v1009 = vpop.f32.mrf.mxu0
      %v1010 = vadd.f32 %v965, %v1009
      %v1011 = vpop.f32.mrf.mxu0
      %1012 = vmatprep.mubr.bf16.mxu0 0
      %1013 = vmatmul.mubr.bf16.gmra.mxu0 %v970
      %v1014 = vpop.f32.mrf.mxu0
      %v1015 = vadd.f32 %v965, %v1014
      %v1016 = vpop.f32.mrf.mxu0
      %v1017 = vpop.f32.mrf.mxu0
      %v1018 = vadd.f32 %v965, %v1017
      %v1019 = vpop.f32.mrf.mxu0
      %1020 = vdwg.mxu0
      %v1021 = vmax.f32 %v1007, 0.0
      %v1022 = vmax.f32 %v1010, 0.0
      %v1023 = vmax.f32 %v1015, 0.0
      %v1024 = vmax.f32 %v1018, 0.0
      %v1025 = vpack.c.bf16 %v1022, %v1021
      %v1026 = vpack.c.bf16 %v1024, %v1023
      %1027 = vmatprep.subr.bf16.mxu0 0
      %1028 = vmatpush1.bf16.msra.mxu0 0
      %1029 = vmatprep.subr.bf16.mxu0 0
      %1030 = vmatpush1.bf16.msra.mxu0 0
      %1031 = vmatprep.subr.bf16.mxu0 0
      %1032 = vmatpush1.bf16.msra.mxu0 0
      %1033 = vmatprep.subr.bf16.mxu0 0
      %1034 = vmatpush1.bf16.msra.mxu0 0
      %1035 = vmatprep.subr.bf16.mxu0 0
      %1036 = vmatpush1.bf16.msra.mxu0 0
      %1037 = vmatprep.subr.bf16.mxu0 0
      %1038 = vmatpush1.bf16.msra.mxu0 0
      %1039 = vmatprep.subr.bf16.mxu0 0
      %1040 = vmatpush1.bf16.msra.mxu0 %v1026
      %1041 = vmatprep.subr.bf16.mxu0 0
      %1042 = vmatpush1.bf16.msra.mxu0 %v1025
      %1043 = vmatprep.subr.bf16.mxu0 0
      %1044 = vmatpush2.bf16.msra.mxu0 0
      %1045 = vmatprep.subr.bf16.mxu0 0
      %1046 = vmatpush2.bf16.msra.mxu0 0
      %1047 = vmatprep.subr.bf16.mxu0 0
      %1048 = vmatpush2.bf16.msra.mxu0 0
      %1049 = vmatprep.subr.bf16.mxu0 0
      %1050 = vmatpush2.bf16.msra.mxu0 0
      %1051 = vmatprep.subr.bf16.mxu0 0
      %1052 = vmatpush2.bf16.msra.mxu0 0
      %1053 = vmatprep.subr.bf16.mxu0 0
      %1054 = vmatpush2.bf16.msra.mxu0 0
      %1055 = vmatprep.subr.bf16.mxu0 0
      %1056 = vmatpush2.bf16.msra.mxu0 0
      %1057 = vmatprep.subr.bf16.mxu0 0
      %1058 = vmatpush2.bf16.msra.mxu0 0
      %1059 = vmatprep.mubr.bf16.mxu0 0
      %1060 = vmatmul.mubr.bf16.gmra.mxu0 %v208
      %v1061 = vpop.f32.mrf.mxu0
      %v1062 = vadd.f32 0.0, %v1061
      %v1063 = vpop.f32.mrf.mxu0
      %v1064 = vpop.f32.mrf.mxu0
      %v1065 = vadd.f32 0.0, %v1064
      %v1066 = vpop.f32.mrf.mxu0
      %1067 = vmatprep.mubr.bf16.mxu0 0
      %1068 = vmatmul.mubr.bf16.gmra.mxu0 %v211
      %v1069 = vpop.f32.mrf.mxu0
      %v1070 = vadd.f32 0.0, %v1069
      %v1071 = vpop.f32.mrf.mxu0
      %v1072 = vpop.f32.mrf.mxu0
      %v1073 = vadd.f32 0.0, %v1072
      %v1074 = vpop.f32.mrf.mxu0
      %1075 = vmatprep.mubr.bf16.mxu0 0
      %1076 = vmatmul.mubr.bf16.gmra.mxu0 %v214
      %v1077 = vpop.f32.mrf.mxu0
      %v1078 = vadd.f32 0.0, %v1077
      %v1079 = vpop.f32.mrf.mxu0
      %v1080 = vpop.f32.mrf.mxu0
      %v1081 = vadd.f32 0.0, %v1080
      %v1082 = vpop.f32.mrf.mxu0
      %1083 = vmatprep.mubr.bf16.mxu0 0
      %1084 = vmatmul.mubr.bf16.gmra.mxu0 %v217
      %v1085 = vpop.f32.mrf.mxu0
      %v1086 = vadd.f32 0.0, %v1085
      %v1087 = vpop.f32.mrf.mxu0
      %v1088 = vpop.f32.mrf.mxu0
      %v1089 = vadd.f32 0.0, %v1088
      %v1090 = vpop.f32.mrf.mxu0
      %1091 = vdwg.mxu0
      %1096 = vrot.lane.b32.xlu0 %v1078, 16
      %v1097 = vpop.permute.xlu0 %1096
      %1098 = vrot.lane.b32.xlu0 %v1081, 16
      %v1099 = vpop.permute.xlu0 %1098
      %1100 = vrot.lane.b32.xlu0 %v1086, 16
      %v1101 = vpop.permute.xlu0 %1100
      %1102 = vrot.lane.b32.xlu0 %v1089, 16
      %v1103 = vpop.permute.xlu0 %1102
      %v1108 = vsel %vm300, %v1062, %v1097
      %v1109 = vsel %vm300, %v1065, %v1099
      %v1110 = vsel %vm300, %v1070, %v1101
      %v1111 = vsel %vm300, %v1073, %v1103
      %v1112 = vld [vmem:[%s1 + $0xa0] sm:$0xff]
      %v1113 = vld [vmem:[%s1 + $0xa8] sm:$0xff]
      %v1114 = vld [vmem:[%s1 + $0xb0] sm:$0xff]
      %v1115 = vld [vmem:[%s1 + $0xb8] sm:$0xff]
      %v1116 = vld [vmem:[%s1 + $0xc5] sm:$0x1]
      %v1117 = vpack.c.bf16 %v1109, %v1108
      %v1118 = vpack.c.bf16 %v1111, %v1110
      %v1119 = vpack.c.bf16 %v1113, %v1112
      %v1120 = vpack.c.bf16 %v1115, %v1114
      %v1121 = vlaneseq
      %v1122 = vshrl.u32 %v1121, 7
      %v1123 = vsub.s32 0, %v1122
      %v1124 = vrot.slane %v1116, %v1123
      %v1126 = vsel %vm206, %v1117, 0
      %v1129 = vsel %vm206, %v1118, 0
      %1131 = vmatprep.subr.bf16.mxu0 0
      %1132 = vmatpush1.bf16.msra.mxu0 0
      %1133 = vmatprep.subr.bf16.mxu0 0
      %1134 = vmatpush1.bf16.msra.mxu0 0
      %1135 = vmatprep.subr.bf16.mxu0 0
      %1136 = vmatpush1.bf16.msra.mxu0 0
      %1137 = vmatprep.subr.bf16.mxu0 0
      %1138 = vmatpush1.bf16.msra.mxu0 0
      %1139 = vmatprep.subr.bf16.mxu0 0
      %1140 = vmatpush1.bf16.msra.mxu0 0
      %1141 = vmatprep.subr.bf16.mxu0 0
      %1142 = vmatpush1.bf16.msra.mxu0 0
      %1143 = vmatprep.subr.bf16.mxu0 0
      %1144 = vmatpush1.bf16.msra.mxu0 %v1120
      %1145 = vmatprep.subr.bf16.mxu0 0
      %1146 = vmatpush1.bf16.msra.mxu0 %v1119
      %1147 = vmatprep.subr.bf16.mxu0 0
      %1148 = vmatpush2.bf16.msra.mxu0 0
      %1149 = vmatprep.subr.bf16.mxu0 0
      %1150 = vmatpush2.bf16.msra.mxu0 0
      %1151 = vmatprep.subr.bf16.mxu0 0
      %1152 = vmatpush2.bf16.msra.mxu0 0
      %1153 = vmatprep.subr.bf16.mxu0 0
      %1154 = vmatpush2.bf16.msra.mxu0 0
      %1155 = vmatprep.subr.bf16.mxu0 0
      %1156 = vmatpush2.bf16.msra.mxu0 0
      %1157 = vmatprep.subr.bf16.mxu0 0
      %1158 = vmatpush2.bf16.msra.mxu0 0
      %1159 = vmatprep.subr.bf16.mxu0 0
      %1160 = vmatpush2.bf16.msra.mxu0 0
      %1161 = vmatprep.subr.bf16.mxu0 0
      %1162 = vmatpush2.bf16.msra.mxu0 0
      %1163 = vmatprep.mubr.bf16.mxu0 0
      %1164 = vmatmul.mubr.bf16.gmra.mxu0 %v1126
      %v1165 = vpop.f32.mrf.mxu0
      %v1166 = vadd.f32 %v1124, %v1165
      %v1167 = vpop.f32.mrf.mxu0
      %v1168 = vpop.f32.mrf.mxu0
      %v1169 = vadd.f32 %v1124, %v1168
      %v1170 = vpop.f32.mrf.mxu0
      %1171 = vmatprep.mubr.bf16.mxu0 0
      %1172 = vmatmul.mubr.bf16.gmra.mxu0 %v1129
      %v1173 = vpop.f32.mrf.mxu0
      %v1174 = vadd.f32 %v1124, %v1173
      %v1175 = vpop.f32.mrf.mxu0
      %v1176 = vpop.f32.mrf.mxu0
      %v1177 = vadd.f32 %v1124, %v1176
      %v1178 = vpop.f32.mrf.mxu0
      %1179 = vdwg.mxu0
      %v1180 = vmax.f32 %v1166, 0.0
      %v1181 = vmax.f32 %v1169, 0.0
      %v1182 = vmax.f32 %v1174, 0.0
      %v1183 = vmax.f32 %v1177, 0.0
      %v1184 = vadd.f32 %v1021, %v1180
      %v1185 = vadd.f32 %v1022, %v1181
      %v1186 = vadd.f32 %v1023, %v1182
      %v1187 = vadd.f32 %v1024, %v1183
      %vm1188 = vcmask 64512
      %1189 = vst.msk [vmem:[%s170] sm:$0xff] %vm1188, %v1184
      %1190 = vst.msk [vmem:[%s170 + $0x8] sm:$0xff] %vm1188, %v1185
      %1191 = vst.msk [vmem:[%s170 + $0x10] sm:$0xff] %vm1188, %v1186
      %1192 = vst.msk [vmem:[%s170 + $0x18] sm:$0xff] %vm1188, %v1187
      %p1193 = scmp.lt.s32.totalorder %s14, 3
      %s1194 = scalar_select %p1193, %s14, 3
      %s1195 = smul.addr %s1194, 4
      %s1196 = smul.addr %s1195, 8
      %s1197 = scalar_lea.vmem %s3, %s1196
      // Predicated region
      $region33: #{feature_extraction_module.1} parent=31 // pred_check
        %p1198 = pneg %p100
      $region34: #{feature_extraction_module.1} parent=31 // pred_check_branch
        %1200 = sbr.rel (%p1198) target = $region36
      $region35: #{feature_extraction_module.1} parent=31 // pred_region
        _
      $region36: #{feature_extraction_module.1} parent=31 // pred_fallthru
        _
    $region32: #{feature_extraction_module.1} parent=5 // pred_fallthru
      _
    %p1201 = scmp.le.s32.totalorder 2, %s9
    // Predicated region
    $region37: #{feature_extraction_module.1} parent=5 // pred_check
      %p1202 = pneg %p1201
    $region38: #{feature_extraction_module.1} parent=5 // pred_check_branch
      %1204 = sbr.rel (%p1202) target = $region40
    $region39: #{feature_extraction_module.1} parent=5 // pred_region
      %s1205 = ssub.s32 %s9, 2
      // Predicated region
      $region41: #{feature_extraction_module.1} parent=39 // pred_check
        %p1206 = pneg %p106
      $region42: #{feature_extraction_module.1} parent=39 // pred_check_branch
        %1208 = sbr.rel (%p1206) target = $region44
      $region43: #{feature_extraction_module.1} parent=39 // pred_region
        %p1209 = scmp.lt.s32.totalorder %s15, 3
        %s1210 = scalar_select %p1209, %s15, 3
        %s1211 = smul.addr %s1210, 4
        %s1212 = smul.addr %s1211, 8
        %s1213 = scalar_lea.vmem %s3, %s1212
      $region44: #{feature_extraction_module.1} parent=39 // pred_fallthru
        _
    $region40: #{feature_extraction_module.1} parent=5 // pred_fallthru
      _
  $region6: #{feature_extraction_module.1} parent=0 // loop_footer
    %s13 = sadd.s32 1, %s9
  $region7: #{feature_extraction_module.1} parent=0 // loop_footer_branch
    %8 = sbr.rel target = $region3
  $region8: #{feature_extraction_module.1} parent=0 // loop_exit
    _

</llo_original>
